<compile_context>
chip_gen: v7x
topology: tpu7x:2x2x1
jax: 0.10.0
libtpu: 0.0.40
codegen_flags: <defaults>
</compile_context>

<pallas_src>
import functools

import jax
import jax.numpy as jnp
from jax.experimental import pallas as pl
from jax.experimental.pallas import tpu as pltpu


def _pick_batch_tile(B: int, T: int, backcast_size: int, forecast_size: int,
                     dtype_bytes: int) -> int:
    """Pick a batch tile that (a) fits double-buffered in ~8 MiB of VMEM on
    every TPU generation, (b) gives >= ~8 grid steps on large batches for
    pipelining / megacore sharding without dropping below ~128-row tiles, and
    (c) is a multiple of 8 (sublane) so tiled BlockSpecs are always legal."""
    per_row = 2 * (T + backcast_size + forecast_size) * dtype_bytes  # dbl-buffered
    vmem_rows = max(8, (8 << 20) // max(per_row, 1))
    tile = min(vmem_rows, 1024, max(128, B // 8))
    tile = max(8, (tile // 8) * 8)          # multiple of 8 (sublane)
    if tile >= B:
        return B                            # full batch: always a legal block
    return tile


def _identity_basis_kernel(theta_ref, back_ref, fore_ref, *, fc_start,
                           backcast_size, forecast_size):
    # Static lane-axis slices of the VMEM tile; writeback DMA is handled by
    # the output BlockSpecs.
    back_ref[...] = theta_ref[:, pl.ds(0, backcast_size)]
    fore_ref[...] = theta_ref[:, pl.ds(fc_start, forecast_size)]


def identity_basis(theta: jax.Array, backcast_size: int, forecast_size: int,
                   *, batch_tile: int | None = None):
    """Pallas implementation of IdentityBasis.forward.

    theta: [B, T] with T >= max(backcast_size, forecast_size).
    Returns (backcast [B, backcast_size], forecast [B, forecast_size]).
    """
    B, T = theta.shape
    assert backcast_size <= T and forecast_size <= T
    fc_start = T - forecast_size  # static start of the "-forecast_size:" slice
    dtype_bytes = jnp.dtype(theta.dtype).itemsize

    if batch_tile is None:
        batch_tile = _pick_batch_tile(B, T, backcast_size, forecast_size,
                                      dtype_bytes)
    batch_tile = min(batch_tile, B)
    grid = (pl.cdiv(B, batch_tile),)

    kernel = functools.partial(
        _identity_basis_kernel,
        fc_start=fc_start,
        backcast_size=backcast_size,
        forecast_size=forecast_size,
    )

    # Purely memory-bound: advertise bytes only so XLA can overlap neighbours.
    cost = pl.CostEstimate(
        flops=0,
        transcendentals=0,
        bytes_accessed=B * (T + backcast_size + forecast_size) * dtype_bytes,
    )

    return pl.pallas_call(
        kernel,
        out_shape=(
            jax.ShapeDtypeStruct((B, backcast_size), theta.dtype),
            jax.ShapeDtypeStruct((B, forecast_size), theta.dtype),
        ),
        grid_spec=pltpu.PrefetchScalarGridSpec(
            num_scalar_prefetch=0,
            grid=grid,
            in_specs=[pl.BlockSpec((batch_tile, T), lambda i: (i, 0))],
            out_specs=(
                pl.BlockSpec((batch_tile, backcast_size), lambda i: (i, 0)),
                pl.BlockSpec((batch_tile, forecast_size), lambda i: (i, 0)),
            ),
        ),
        compiler_params=pltpu.CompilerParams(
            dimension_semantics=("parallel",)),
        cost_estimate=cost,
    )(theta)


def _check(theta, backcast_size, forecast_size, **kw):
    back, fore = identity_basis(theta, backcast_size, forecast_size, **kw)
    back, fore = jax.block_until_ready((back, fore))
    ref_back = theta[:, :backcast_size]
    ref_fore = theta[:, -forecast_size:]
    assert back.shape == ref_back.shape and fore.shape == ref_fore.shape
    assert jnp.array_equal(back, ref_back)
    assert jnp.array_equal(fore, ref_fore)


if __name__ == "__main__":
    key = jax.random.PRNGKey(0)
    backcast_size, forecast_size = 16, 8

    k1, k2, k3 = jax.random.split(key, 3)

    # Standard N-BEATS identity case: theta_dim = backcast + forecast.
    # batch=256 -> auto batch_tile=128 -> 2-step grid (pipelined path).
    theta = jax.random.normal(k1, (256, backcast_size + forecast_size),
                              dtype=jnp.float32)
    _check(theta, backcast_size, forecast_size)

    # Overlapping-slice case (backcast + forecast > theta_dim), explicit tile.
    theta_ovl = jax.random.normal(k2, (64, 20), dtype=jnp.float32)
    _check(theta_ovl, backcast_size, forecast_size, batch_tile=32)

    # Non-divisible batch: cdiv grid with masked partial last tile.
    theta_rag = jax.random.normal(k3, (100, 24), dtype=jnp.float32)
    _check(theta_rag, backcast_size, forecast_size, batch_tile=32)

    print("KERNEL_OK")
</pallas_src>

<mosaic_0001>
module attributes {stable_mosaic.version = 11 : i64} {
  func.func @_identity_basis_kernel(%arg0: i32, %arg1: memref<128x24xf32, #tpu.memory_space<vmem>>, %arg2: memref<128x16xf32, #tpu.memory_space<vmem>>, %arg3: memref<128x8xf32, #tpu.memory_space<vmem>>) attributes {dimension_semantics = [#tpu.dimension_semantics<parallel>], iteration_bounds = array<i64: 2>, scalar_prefetch = 0 : i64, scratch_operands = 0 : i64, tpu.core_type = #tpu.core_type<tc>, window_params = [{transform_indices = @transform_0, window_bounds = array<i64: 128, 24>}, {transform_indices = @transform_1, window_bounds = array<i64: 128, 16>}, {transform_indices = @transform_2, window_bounds = array<i64: 128, 8>}]} {
    %c0 = arith.constant 0 : index
    %c0_0 = arith.constant 0 : index
    %0 = vector.load %arg1[%c0, %c0_0] : memref<128x24xf32, #tpu.memory_space<vmem>>, vector<128x16xf32>
    %c0_1 = arith.constant 0 : index
    %c0_2 = arith.constant 0 : index
    %1 = vector.load %arg2[%c0_1, %c0_2] : memref<128x16xf32, #tpu.memory_space<vmem>>, vector<128x16xf32>
    tpu.vector_store %arg2[%c0_1, %c0_2], %0 {strides = array<i32>} : memref<128x16xf32, #tpu.memory_space<vmem>>, vector<128x16xf32>,
    %c0_3 = arith.constant 0 : index
    %c16 = arith.constant 16 : index
    %2 = vector.load %arg1[%c0_3, %c16] : memref<128x24xf32, #tpu.memory_space<vmem>>, vector<128x8xf32>
    %c0_4 = arith.constant 0 : index
    %c0_5 = arith.constant 0 : index
    %3 = vector.load %arg3[%c0_4, %c0_5] : memref<128x8xf32, #tpu.memory_space<vmem>>, vector<128x8xf32>
    tpu.vector_store %arg3[%c0_4, %c0_5], %2 {strides = array<i32>} : memref<128x8xf32, #tpu.memory_space<vmem>>, vector<128x8xf32>,
    return
  }
  func.func @transform_0(%arg0: i32) -> (i32, i32) {
    %c0_i32 = arith.constant 0 : i32
    %c0_i32_0 = arith.constant 0 : i32
    return %arg0, %c0_i32 : i32, i32
  }
  func.func @transform_1(%arg0: i32) -> (i32, i32) {
    %c0_i32 = arith.constant 0 : i32
    %c0_i32_0 = arith.constant 0 : i32
    return %arg0, %c0_i32 : i32, i32
  }
  func.func @transform_2(%arg0: i32) -> (i32, i32) {
    %c0_i32 = arith.constant 0 : i32
    %c0_i32_0 = arith.constant 0 : i32
    return %arg0, %c0_i32 : i32, i32
  }
}

</mosaic_0001>

<llo_original>
// kernel: tpu_custom_call.1
$region0: #{tpu_custom_call.1}
  #allocation0 [shape = 'u32[]', space=smem, size = 0x4, offset = 0x4, fixed_abs, tag = 'smem constant byte address 0x4 - core index']
  #allocation1 [shape = 'u32[144,128]{1,0:T(1,128)}', space=vmem, size = 0x12000, scoped, tag = 'internal scratch']
  %s0 = inlined_call_operand.vmem [shape: f32[256,24], index: 0, kind: input, shape index: {}]
  %s1 = inlined_call_operand.vmem [shape: f32[256,16], index: 1, kind: output, shape index: {0}]
  %s2 = inlined_call_operand.vmem [shape: f32[256,8], index: 2, kind: output, shape index: {1}]
  %3 = xla_tuple %s1, %s2
  %s4 = sld [smem:[#allocation0]]
  $region45: #{tpu_custom_call.1} parent=0
    _
  %s6 = ssub.s32 1, %s4
  %s7 = scalar_select 0, %s6, %s4
  loop: start=0, step=1, limit=4
  $region2: #{tpu_custom_call.1} parent=0 // loop_pre_header
    _
  $region3: #{tpu_custom_call.1} parent=0 // loop_header
    %s9 = sphi 0, %s13
    %p10 = scmp.ge.s32.totalorder %s9, 4
    %s19 = sphi 0, %s21
    %s22 = sphi 0, %s19
    %s23 = sphi 0, %s22
    %s39 = sphi 0, %s23
    %s45 = sphi 0, %s47
    %s48 = sphi 0, %s45
    %s49 = sphi 0, %s48
    %s65 = sphi 0, %s49
    %s71 = sphi 0, %s73
    %s74 = sphi 0, %s71
    %s75 = sphi 0, %s74
    %s91 = sphi 0, %s75
  $region4: #{tpu_custom_call.1} parent=0 // loop_header_branch
    %12 = sbr.rel (%p10) target = $region8
  $region5: #{tpu_custom_call.1} parent=0 // loop_body
    %s14 = ssub.s32 %s9, 1
    %s15 = ssub.s32 %s9, 2
    %s16 = sadd.s32 %s9, 1
    %s17 = ssub.s32 %s9, %s16
    %p18 = scmp.eq.s32.totalorder %s17, 0
    %s20 = sadd.s32 %s19, 1
    %s21 = scalar_select %p18, %s19, %s20
    %p24 = pneg %p18
    %p25 = scmp.eq.s32.totalorder %s9, 1
    %p26 = por %p24, %p25
    %p27 = scmp.ne.s32.totalorder %s19, %s22
    %p28 = scmp.eq.s32.totalorder %s9, 0
    %p29 = por %p27, %p28
    %p30 = scmp.ne.s32.totalorder %s19, %s22
    %p31 = scmp.eq.s32.totalorder %s14, 1
    %p32 = por %p30, %p31
    %p33 = scmp.ne.s32.totalorder %s22, %s23
    %p34 = scmp.eq.s32.totalorder %s14, 0
    %p35 = por %p33, %p34
    %p36 = scmp.ne.s32.totalorder %s22, %s23
    %p37 = scmp.eq.s32.totalorder %s15, 1
    %p38 = por %p36, %p37
    %p40 = scmp.ne.s32.totalorder %s23, %s39
    %p41 = scmp.eq.s32.totalorder %s15, 0
    %p42 = por %p40, %p41
    %s43 = ssub.s32 %s9, %s16
    %p44 = scmp.eq.s32.totalorder %s43, 0
    %s46 = sadd.s32 %s45, 1
    %s47 = scalar_select %p44, %s45, %s46
    %p50 = pneg %p44
    %p51 = scmp.eq.s32.totalorder %s9, 1
    %p52 = por %p50, %p51
    %p53 = scmp.ne.s32.totalorder %s45, %s48
    %p54 = scmp.eq.s32.totalorder %s9, 0
    %p55 = por %p53, %p54
    %p56 = scmp.ne.s32.totalorder %s45, %s48
    %p57 = scmp.eq.s32.totalorder %s14, 1
    %p58 = por %p56, %p57
    %p59 = scmp.ne.s32.totalorder %s48, %s49
    %p60 = scmp.eq.s32.totalorder %s14, 0
    %p61 = por %p59, %p60
    %p62 = scmp.ne.s32.totalorder %s48, %s49
    %p63 = scmp.eq.s32.totalorder %s15, 1
    %p64 = por %p62, %p63
    %p66 = scmp.ne.s32.totalorder %s49, %s65
    %p67 = scmp.eq.s32.totalorder %s15, 0
    %p68 = por %p66, %p67
    %s69 = ssub.s32 %s9, %s16
    %p70 = scmp.eq.s32.totalorder %s69, 0
    %s72 = sadd.s32 %s71, 1
    %s73 = scalar_select %p70, %s71, %s72
    %p76 = pneg %p70
    %p77 = scmp.eq.s32.totalorder %s9, 1
    %p78 = por %p76, %p77
    %p79 = scmp.ne.s32.totalorder %s71, %s74
    %p80 = scmp.eq.s32.totalorder %s9, 0
    %p81 = por %p79, %p80
    %p82 = scmp.ne.s32.totalorder %s71, %s74
    %p83 = scmp.eq.s32.totalorder %s14, 1
    %p84 = por %p82, %p83
    %p85 = scmp.ne.s32.totalorder %s74, %s75
    %p86 = scmp.eq.s32.totalorder %s14, 0
    %p87 = por %p85, %p86
    %p88 = scmp.ne.s32.totalorder %s74, %s75
    %p89 = scmp.eq.s32.totalorder %s15, 1
    %p90 = por %p88, %p89
    %p92 = scmp.ne.s32.totalorder %s75, %s91
    %p93 = scmp.eq.s32.totalorder %s15, 0
    %p94 = por %p92, %p93
    %p95 = scmp.le.s32.totalorder 1, %s9
    %p96 = scmp.lt.s32.totalorder %s9, 3
    %p97 = pnand %p95, %p96
    %p98 = pneg %p97
    // Predicated region
    $region9: #{tpu_custom_call.1} parent=5 // pred_check
      _
    $region10: #{tpu_custom_call.1} parent=5 // pred_check_branch
      %100 = sbr.rel (%p97) target = $region12
    $region11: #{tpu_custom_call.1} parent=5 // pred_region
      %s101 = ssub.s32 %s9, 1
    $region12: #{tpu_custom_call.1} parent=5 // pred_fallthru
      _
    %p102 = scmp.lt.s32.totalorder %s9, 2
    // Predicated region
    $region13: #{tpu_custom_call.1} parent=5 // pred_check
      %p103 = pneg %p102
    $region14: #{tpu_custom_call.1} parent=5 // pred_check_branch
      %105 = sbr.rel (%p103) target = $region16
    $region15: #{tpu_custom_call.1} parent=5 // pred_region
      // Predicated region
      $region17: #{tpu_custom_call.1} parent=15 // pred_check
        %p106 = pneg %p29
      $region18: #{tpu_custom_call.1} parent=15 // pred_check_branch
        %108 = sbr.rel (%p106) target = $region20
      $region19: #{tpu_custom_call.1} parent=15 // pred_region
        %s109 = smul.u32 16, %s9
        %p110 = scmp.lt.s32.totalorder %s109, 31
        %s111 = scalar_select %p110, %s109, 31
        %s112 = smul.addr %s111, 8
        %s113 = scalar_lea.vmem %s0, %s112
        %s114 = smul.u32 16, %s9
      $region20: #{tpu_custom_call.1} parent=15 // pred_fallthru
        _
    $region16: #{tpu_custom_call.1} parent=5 // pred_fallthru
      _
    %p115 = scmp.le.s32.totalorder 1, %s9
    %p116 = scmp.lt.s32.totalorder %s9, 3
    %p117 = pnand %p115, %p116
    %p118 = pneg %p117
    // Predicated region
    $region21: #{tpu_custom_call.1} parent=5 // pred_check
      _
    $region22: #{tpu_custom_call.1} parent=5 // pred_check_branch
      %120 = sbr.rel (%p117) target = $region24
    $region23: #{tpu_custom_call.1} parent=5 // pred_region
      %s121 = ssub.s32 %s9, 1
      %s122 = smul.u32 16, %s14
      %p123 = scmp.lt.s32.totalorder %s122, 31
      %s124 = scalar_select %p123, %s122, 31
      %s125 = smul.addr %s124, 8
      %s126 = scalar_lea.vmem %s0, %s125
      %p127 = pneg %p35
      %p128 = pneg %p32
      %p129 = pneg %p61
      %p130 = pneg %p58
      %s131 = smul.u32 16, %s14
      %p132 = scmp.lt.s32.totalorder %s131, 31
      %s133 = scalar_select %p132, %s131, 31
      %s134 = smul.addr %s133, 8
      %s135 = scalar_lea.vmem %s1, %s134
      %p136 = pneg %p87
      %p137 = pneg %p84
      %s138 = smul.u32 16, %s14
      %p139 = scmp.lt.s32.totalorder %s138, 31
      %s140 = scalar_select %p139, %s138, 31
      %s141 = smul.addr %s140, 8
      %s142 = scalar_lea.vmem %s2, %s141
      %s143 = smul.u32 16, %s14
      %p144 = scmp.lt.s32.totalorder %s143, 31
      %s145 = scalar_select %p144, %s143, 31
      %s146 = smul.addr %s145, 8
      %s147 = scalar_lea.vmem %s0, %s146
      %s148 = smul.u32 16, %s14
      %s149 = smul.u32 16, %s14
      %p150 = scmp.lt.s32.totalorder %s149, 31
      %s151 = scalar_select %p150, %s149, 31
      %s152 = smul.addr %s151, 8
      %s153 = scalar_lea.vmem %s1, %s152
      %s154 = smul.u32 16, %s14
      %s155 = smul.u32 16, %s14
      %p156 = scmp.lt.s32.totalorder %s155, 31
      %s157 = scalar_select %p156, %s155, 31
      %s158 = smul.addr %s157, 8
      %s159 = scalar_lea.vmem %s2, %s158
      %s160 = smul.u32 16, %s14
      %v161 = vld [vmem:[%s147] sm:$0xff]
      %v162 = vld [vmem:[%s147 + $0x8] sm:$0xff]
      %v163 = vld [vmem:[%s147 + $0x10] sm:$0xff]
      %v164 = vld [vmem:[%s147 + $0x18] sm:$0xff]
      %v165 = vld [vmem:[%s147 + $0x20] sm:$0xff]
      %v166 = vld [vmem:[%s147 + $0x28] sm:$0xff]
      %v167 = vld [vmem:[%s147 + $0x30] sm:$0xff]
      %v168 = vld [vmem:[%s147 + $0x38] sm:$0xff]
      %v169 = vld [vmem:[%s147 + $0x40] sm:$0xff]
      %v170 = vld [vmem:[%s147 + $0x48] sm:$0xff]
      %v171 = vld [vmem:[%s147 + $0x50] sm:$0xff]
      %v172 = vld [vmem:[%s147 + $0x58] sm:$0xff]
      %v173 = vld [vmem:[%s147 + $0x60] sm:$0xff]
      %v174 = vld [vmem:[%s147 + $0x68] sm:$0xff]
      %v175 = vld [vmem:[%s147 + $0x70] sm:$0xff]
      %v176 = vld [vmem:[%s147 + $0x78] sm:$0xff]
      %vm177 = vcmask 130048
      %178 = vst.msk [vmem:[%s153] sm:$0xff] %vm177, %v161
      %179 = vst.msk [vmem:[%s153 + $0x8] sm:$0xff] %vm177, %v162
      %180 = vst.msk [vmem:[%s153 + $0x10] sm:$0xff] %vm177, %v163
      %181 = vst.msk [vmem:[%s153 + $0x18] sm:$0xff] %vm177, %v164
      %182 = vst.msk [vmem:[%s153 + $0x20] sm:$0xff] %vm177, %v165
      %183 = vst.msk [vmem:[%s153 + $0x28] sm:$0xff] %vm177, %v166
      %184 = vst.msk [vmem:[%s153 + $0x30] sm:$0xff] %vm177, %v167
      %185 = vst.msk [vmem:[%s153 + $0x38] sm:$0xff] %vm177, %v168
      %186 = vst.msk [vmem:[%s153 + $0x40] sm:$0xff] %vm177, %v169
      %187 = vst.msk [vmem:[%s153 + $0x48] sm:$0xff] %vm177, %v170
      %188 = vst.msk [vmem:[%s153 + $0x50] sm:$0xff] %vm177, %v171
      %189 = vst.msk [vmem:[%s153 + $0x58] sm:$0xff] %vm177, %v172
      %190 = vst.msk [vmem:[%s153 + $0x60] sm:$0xff] %vm177, %v173
      %191 = vst.msk [vmem:[%s153 + $0x68] sm:$0xff] %vm177, %v174
      %192 = vst.msk [vmem:[%s153 + $0x70] sm:$0xff] %vm177, %v175
      %193 = vst.msk [vmem:[%s153 + $0x78] sm:$0xff] %vm177, %v176
      %v194 = vld [vmem:[%s147] sm:$0xff]
      %v195 = vld [vmem:[%s147 + $0x8] sm:$0xff]
      %v196 = vld [vmem:[%s147 + $0x10] sm:$0xff]
      %v197 = vld [vmem:[%s147 + $0x18] sm:$0xff]
      %v198 = vld [vmem:[%s147 + $0x20] sm:$0xff]
      %v199 = vld [vmem:[%s147 + $0x28] sm:$0xff]
      %v200 = vld [vmem:[%s147 + $0x30] sm:$0xff]
      %v201 = vld [vmem:[%s147 + $0x38] sm:$0xff]
      %v202 = vld [vmem:[%s147 + $0x40] sm:$0xff]
      %v203 = vld [vmem:[%s147 + $0x48] sm:$0xff]
      %v204 = vld [vmem:[%s147 + $0x50] sm:$0xff]
      %v205 = vld [vmem:[%s147 + $0x58] sm:$0xff]
      %v206 = vld [vmem:[%s147 + $0x60] sm:$0xff]
      %v207 = vld [vmem:[%s147 + $0x68] sm:$0xff]
      %v208 = vld [vmem:[%s147 + $0x70] sm:$0xff]
      %v209 = vld [vmem:[%s147 + $0x78] sm:$0xff]
      %226 = vrot.lane.b32.xlu0 %v194, 112
      %v227 = vpop.permute.xlu0 %226
      %228 = vrot.lane.b32.xlu0 %v195, 112
      %v229 = vpop.permute.xlu0 %228
      %230 = vrot.lane.b32.xlu0 %v196, 112
      %v231 = vpop.permute.xlu0 %230
      %232 = vrot.lane.b32.xlu0 %v197, 112
      %v233 = vpop.permute.xlu0 %232
      %234 = vrot.lane.b32.xlu0 %v198, 112
      %v235 = vpop.permute.xlu0 %234
      %236 = vrot.lane.b32.xlu0 %v199, 112
      %v237 = vpop.permute.xlu0 %236
      %238 = vrot.lane.b32.xlu0 %v200, 112
      %v239 = vpop.permute.xlu0 %238
      %240 = vrot.lane.b32.xlu0 %v201, 112
      %v241 = vpop.permute.xlu0 %240
      %242 = vrot.lane.b32.xlu0 %v202, 112
      %v243 = vpop.permute.xlu0 %242
      %244 = vrot.lane.b32.xlu0 %v203, 112
      %v245 = vpop.permute.xlu0 %244
      %246 = vrot.lane.b32.xlu0 %v204, 112
      %v247 = vpop.permute.xlu0 %246
      %248 = vrot.lane.b32.xlu0 %v205, 112
      %v249 = vpop.permute.xlu0 %248
      %250 = vrot.lane.b32.xlu0 %v206, 112
      %v251 = vpop.permute.xlu0 %250
      %252 = vrot.lane.b32.xlu0 %v207, 112
      %v253 = vpop.permute.xlu0 %252
      %254 = vrot.lane.b32.xlu0 %v208, 112
      %v255 = vpop.permute.xlu0 %254
      %256 = vrot.lane.b32.xlu0 %v209, 112
      %v257 = vpop.permute.xlu0 %256
      %vm274 = vcmask 64512
      %275 = vst.msk [vmem:[%s159] sm:$0xff] %vm274, %v227
      %276 = vst.msk [vmem:[%s159 + $0x8] sm:$0xff] %vm274, %v229
      %277 = vst.msk [vmem:[%s159 + $0x10] sm:$0xff] %vm274, %v231
      %278 = vst.msk [vmem:[%s159 + $0x18] sm:$0xff] %vm274, %v233
      %279 = vst.msk [vmem:[%s159 + $0x20] sm:$0xff] %vm274, %v235
      %280 = vst.msk [vmem:[%s159 + $0x28] sm:$0xff] %vm274, %v237
      %281 = vst.msk [vmem:[%s159 + $0x30] sm:$0xff] %vm274, %v239
      %282 = vst.msk [vmem:[%s159 + $0x38] sm:$0xff] %vm274, %v241
      %283 = vst.msk [vmem:[%s159 + $0x40] sm:$0xff] %vm274, %v243
      %284 = vst.msk [vmem:[%s159 + $0x48] sm:$0xff] %vm274, %v245
      %285 = vst.msk [vmem:[%s159 + $0x50] sm:$0xff] %vm274, %v247
      %286 = vst.msk [vmem:[%s159 + $0x58] sm:$0xff] %vm274, %v249
      %287 = vst.msk [vmem:[%s159 + $0x60] sm:$0xff] %vm274, %v251
      %288 = vst.msk [vmem:[%s159 + $0x68] sm:$0xff] %vm274, %v253
      %289 = vst.msk [vmem:[%s159 + $0x70] sm:$0xff] %vm274, %v255
      %290 = vst.msk [vmem:[%s159 + $0x78] sm:$0xff] %vm274, %v257
      %s291 = smul.u32 16, %s14
      %p292 = scmp.lt.s32.totalorder %s291, 31
      %s293 = scalar_select %p292, %s291, 31
      %s294 = smul.addr %s293, 8
      %s295 = scalar_lea.vmem %s1, %s294
      %s296 = smul.u32 16, %s14
      %p297 = scmp.lt.s32.totalorder %s296, 31
      %s298 = scalar_select %p297, %s296, 31
      %s299 = smul.addr %s298, 8
      %s300 = scalar_lea.vmem %s2, %s299
      // Predicated region
      $region25: #{tpu_custom_call.1} parent=23 // pred_check
        %p301 = pneg %p58
      $region26: #{tpu_custom_call.1} parent=23 // pred_check_branch
        %303 = sbr.rel (%p301) target = $region28
      $region27: #{tpu_custom_call.1} parent=23 // pred_region
        %s304 = smul.u32 16, %s14
      $region28: #{tpu_custom_call.1} parent=23 // pred_fallthru
        _
      // Predicated region
      $region29: #{tpu_custom_call.1} parent=23 // pred_check
        %p305 = pneg %p84
      $region30: #{tpu_custom_call.1} parent=23 // pred_check_branch
        %307 = sbr.rel (%p305) target = $region32
      $region31: #{tpu_custom_call.1} parent=23 // pred_region
        %s308 = smul.u32 16, %s14
      $region32: #{tpu_custom_call.1} parent=23 // pred_fallthru
        _
    $region24: #{tpu_custom_call.1} parent=5 // pred_fallthru
      _
    %p309 = scmp.le.s32.totalorder 2, %s9
    // Predicated region
    $region33: #{tpu_custom_call.1} parent=5 // pred_check
      %p310 = pneg %p309
    $region34: #{tpu_custom_call.1} parent=5 // pred_check_branch
      %312 = sbr.rel (%p310) target = $region36
    $region35: #{tpu_custom_call.1} parent=5 // pred_region
      %s313 = ssub.s32 %s9, 2
      // Predicated region
      $region37: #{tpu_custom_call.1} parent=35 // pred_check
        %p314 = pneg %p64
      $region38: #{tpu_custom_call.1} parent=35 // pred_check_branch
        %316 = sbr.rel (%p314) target = $region40
      $region39: #{tpu_custom_call.1} parent=35 // pred_region
        %s317 = smul.u32 16, %s15
        %p318 = scmp.lt.s32.totalorder %s317, 31
        %s319 = scalar_select %p318, %s317, 31
        %s320 = smul.addr %s319, 8
        %s321 = scalar_lea.vmem %s1, %s320
      $region40: #{tpu_custom_call.1} parent=35 // pred_fallthru
        _
      // Predicated region
      $region41: #{tpu_custom_call.1} parent=35 // pred_check
        %p322 = pneg %p90
      $region42: #{tpu_custom_call.1} parent=35 // pred_check_branch
        %324 = sbr.rel (%p322) target = $region44
      $region43: #{tpu_custom_call.1} parent=35 // pred_region
        %s325 = smul.u32 16, %s15
        %p326 = scmp.lt.s32.totalorder %s325, 31
        %s327 = scalar_select %p326, %s325, 31
        %s328 = smul.addr %s327, 8
        %s329 = scalar_lea.vmem %s2, %s328
      $region44: #{tpu_custom_call.1} parent=35 // pred_fallthru
        _
    $region36: #{tpu_custom_call.1} parent=5 // pred_fallthru
      _
  $region6: #{tpu_custom_call.1} parent=0 // loop_footer
    %s13 = sadd.s32 1, %s9
  $region7: #{tpu_custom_call.1} parent=0 // loop_footer_branch
    %8 = sbr.rel target = $region3
  $region8: #{tpu_custom_call.1} parent=0 // loop_exit
    _

</llo_original>
